<compile_context>
chip_gen: v6e
topology: v6e:2x2x1
jax: 0.10.0
libtpu: 0.0.40
codegen_flags: <defaults>
</compile_context>

<pallas_src>
import functools

import jax
import jax.numpy as jnp
from jax.experimental import pallas as pl
from jax.experimental.pallas import tpu as pltpu


def _round_up(x: int, m: int) -> int:
    return ((x + m - 1) // m) * m


def _dc_kernel(hq_ref, cg_ref,
               wg_ref, bg_ref,
               w1_ref, b1_ref,
               w2_ref, b2_ref,
               out_ref, x_sc, *, nq_tiles):
    i = pl.program_id(0)

    # Stream select: query tiles pass through unchanged (GRL forward is
    # identity); graph tiles first go through graph_proj.
    @pl.when(i < nq_tiles)
    def _():
        x_sc[...] = hq_ref[...]                       # bf16 copy

    @pl.when(i >= nq_tiles)
    def _():
        g = jnp.dot(cg_ref[...], wg_ref[...],
                    preferred_element_type=jnp.float32)    # (TB, Hp) f32
        x_sc[...] = (g + bg_ref[...]).astype(jnp.bfloat16)

    # Shared classifier MLP: Linear(H,128) -> ReLU -> Linear(128, padded 128).
    h1 = jnp.dot(x_sc[...], w1_ref[...],
                 preferred_element_type=jnp.float32)        # (TB, 128) f32
    h1 = jnp.maximum(h1 + b1_ref[...], 0.0)
    out_ref[...] = (jnp.dot(h1.astype(jnp.bfloat16), w2_ref[...],
                            preferred_element_type=jnp.float32)
                    + b2_ref[...])                          # (TB, NOUTp) f32


def prepare_params(params):
    """Pad lane dims to multiples of 128 and cast weights to bf16 (stored
    that way in HBM).  Biases stay f32 (bias add / ReLU done in f32)."""
    wg, bg = params["wg"], params["bg"]
    w1, b1 = params["w1"], params["b1"]
    w2, b2 = params["w2"], params["b2"]
    G, H = wg.shape
    NOUT = w2.shape[1]
    Gp, Hp, NOUTp = _round_up(G, 128), _round_up(H, 128), _round_up(NOUT, 128)

    wg_p = jnp.zeros((Gp, Hp), jnp.bfloat16).at[:G, :H].set(wg.astype(jnp.bfloat16))
    bg_p = jnp.zeros((1, Hp), jnp.float32).at[:, :H].set(bg.astype(jnp.float32))
    w1_p = jnp.zeros((Hp, 128), jnp.bfloat16).at[:H, :].set(w1.astype(jnp.bfloat16))
    b1_p = b1.astype(jnp.float32).reshape(1, 128)
    w2_p = jnp.zeros((128, NOUTp), jnp.bfloat16).at[:, :NOUT].set(w2.astype(jnp.bfloat16))
    b2_p = jnp.zeros((1, NOUTp), jnp.float32).at[:, :NOUT].set(b2.astype(jnp.float32))

    dims = dict(G=G, H=H, NOUT=NOUT, Gp=Gp, Hp=Hp, NOUTp=NOUTp)
    return dict(wg=wg_p, bg=bg_p, w1=w1_p, b1=b1_p, w2=w2_p, b2=b2_p, dims=dims)


def domain_classifier_forward(h_query, c_graph, prepped, lambda_grl=1.0,
                              tile_rows=512):
    """Forward pass.  lambda_grl only affects the (unimplemented) backward."""
    del lambda_grl  # identity in forward
    d = prepped["dims"]
    G, H, NOUT = d["G"], d["H"], d["NOUT"]
    Gp, Hp, NOUTp = d["Gp"], d["Hp"], d["NOUTp"]

    b1_, h_in = h_query.shape
    b2_, g_in = c_graph.shape
    assert h_in == H and g_in == G and b1_ > 0 and b2_ > 0

    # Batch tiling: tile is a multiple of 8 rows, capped at `tile_rows`.
    tb = min(tile_rows, _round_up(max(b1_, b2_), 8))
    b1p = _round_up(b1_, tb)
    b2p = _round_up(b2_, tb)
    nq_tiles = b1p // tb
    ng_tiles = b2p // tb
    n_steps = nq_tiles + ng_tiles

    # Zero-pad activations (rows to tile multiple, lanes to 128 multiple),
    # cast to bf16 to halve HBM traffic.
    hq_p = jnp.zeros((b1p, Hp), jnp.bfloat16).at[:b1_, :H].set(
        h_query.astype(jnp.bfloat16))
    cg_p = jnp.zeros((b2p, Gp), jnp.bfloat16).at[:b2_, :G].set(
        c_graph.astype(jnp.bfloat16))

    wg, bg = prepped["wg"], prepped["bg"]
    w1, b1 = prepped["w1"], prepped["b1"]
    w2, b2 = prepped["w2"], prepped["b2"]

    flops = (2 * b2p * Gp * Hp
             + 2 * (b1p + b2p) * Hp * 128
             + 2 * (b1p + b2p) * 128 * NOUTp)
    bytes_accessed = (hq_p.size * 2 + cg_p.size * 2
                      + wg.size * 2 + w1.size * 2 + w2.size * 2
                      + bg.size * 4 + b1.size * 4 + b2.size * 4
                      + (b1p + b2p) * NOUTp * 4)

    const2d = lambda i: (0, 0)
    q_clamp = max(nq_tiles - 1, 0)

    out = pl.pallas_call(
        functools.partial(_dc_kernel, nq_tiles=nq_tiles),
        out_shape=jax.ShapeDtypeStruct((b1p + b2p, NOUTp), jnp.float32),
        grid=(n_steps,),
        in_specs=[
            # query tiles advance during the query phase, then stay clamped
            # (same block index -> no re-fetch) during the graph phase.
            pl.BlockSpec((tb, Hp), lambda i: (jnp.minimum(i, q_clamp), 0)),
            # graph tiles stay at block 0 during the query phase, then advance.
            pl.BlockSpec((tb, Gp), lambda i: (jnp.maximum(i - nq_tiles, 0), 0)),
            # weights / biases: constant index maps -> fetched once, resident.
            pl.BlockSpec((Gp, Hp), const2d),
            pl.BlockSpec((1, Hp), const2d),
            pl.BlockSpec((Hp, 128), const2d),
            pl.BlockSpec((1, 128), const2d),
            pl.BlockSpec((128, NOUTp), const2d),
            pl.BlockSpec((1, NOUTp), const2d),
        ],
        out_specs=pl.BlockSpec((tb, NOUTp), lambda i: (i, 0)),
        scratch_shapes=[pltpu.VMEM((tb, Hp), jnp.bfloat16)],
        compiler_params=pltpu.CompilerParams(
            dimension_semantics=("parallel",),
            vmem_limit_bytes=48 * 1024 * 1024),
        cost_estimate=pl.CostEstimate(flops=flops, transcendentals=0,
                                      bytes_accessed=bytes_accessed),
    )(hq_p, cg_p, wg, bg, w1, b1, w2, b2)

    logits_q = out[:b1_, :NOUT]
    logits_g = out[b1p:b1p + b2_, :NOUT]
    return jnp.concatenate([logits_q, logits_g], axis=0)


def init_params(key, dim_graph, hidden_dim):
    """Deterministic synthetic parameters (shapes match the nn.Module),
    stored pre-transposed as (in, out) so the kernel computes y = x @ W + b."""
    k = jax.random.split(key, 6)
    wg = jax.random.normal(k[0], (dim_graph, hidden_dim), jnp.float32) * 0.05
    bg = jax.random.normal(k[1], (1, hidden_dim), jnp.float32) * 0.01
    w1 = jax.random.normal(k[2], (hidden_dim, 128), jnp.float32) * 0.05
    b1 = jax.random.normal(k[3], (1, 128), jnp.float32) * 0.01
    w2 = jax.random.normal(k[4], (128, 2), jnp.float32) * 0.05
    b2 = jax.random.normal(k[5], (1, 2), jnp.float32) * 0.01
    return dict(wg=wg, bg=bg, w1=w1, b1=b1, w2=w2, b2=b2)


def reference_forward(h_query, c_graph, params):
    """Pure-JAX f32 reference matching the PyTorch forward."""
    g_feat = c_graph @ params["wg"] + params["bg"]
    combined = jnp.concatenate([h_query, g_feat], axis=0)
    h1 = jnp.maximum(combined @ params["w1"] + params["b1"], 0.0)
    return h1 @ params["w2"] + params["b2"]


if __name__ == "__main__":
    key = jax.random.PRNGKey(0)
    k_param, k_hq, k_cg = jax.random.split(key, 3)

    dim_graph = 16      # graph-embedding dim
    hidden_dim = 256    # PyTorch module default
    b_query = 8         # batch of query hidden features
    b_graph = 24        # batch of graph embeddings

    params = init_params(k_param, dim_graph, hidden_dim)
    prepped = prepare_params(params)

    h_query = jax.random.normal(k_hq, (b_query, hidden_dim), jnp.float32)
    c_graph = jax.random.normal(k_cg, (b_graph, dim_graph), jnp.float32)

    logits = domain_classifier_forward(h_query, c_graph, prepped, lambda_grl=0.5)
    logits = jax.block_until_ready(logits)

    ref = reference_forward(h_query, c_graph, params)
    assert logits.shape == (b_query + b_graph, 2), logits.shape
    # bf16 matmul operands with f32 accumulation -> loosened tolerance vs f32 ref.
    assert jnp.allclose(logits, ref, atol=2e-2, rtol=2e-2), (
        "mismatch vs reference: max abs err = "
        f"{float(jnp.max(jnp.abs(logits - ref)))}")

    print("KERNEL_OK")
</pallas_src>

<mosaic_0001>
module attributes {stable_mosaic.version = 11 : i64} {
  func.func @_dc_kernel(%arg0: i32, %arg1: memref<24x256xbf16, #tpu.memory_space<vmem>>, %arg2: memref<24x128xbf16, #tpu.memory_space<vmem>>, %arg3: memref<128x256xbf16, #tpu.memory_space<vmem>>, %arg4: memref<1x256xf32, #tpu.memory_space<vmem>>, %arg5: memref<256x128xbf16, #tpu.memory_space<vmem>>, %arg6: memref<1x128xf32, #tpu.memory_space<vmem>>, %arg7: memref<128x128xbf16, #tpu.memory_space<vmem>>, %arg8: memref<1x128xf32, #tpu.memory_space<vmem>>, %arg9: memref<24x128xf32, #tpu.memory_space<vmem>>, %arg10: memref<24x256xbf16, #tpu.memory_space<vmem>>) attributes {dimension_semantics = [#tpu.dimension_semantics<parallel>], iteration_bounds = array<i64: 2>, scalar_prefetch = 0 : i64, scratch_operands = 1 : i64, tpu.core_type = #tpu.core_type<tc>, window_params = [{transform_indices = @transform_0, window_bounds = array<i64: 24, 256>}, {transform_indices = @transform_1, window_bounds = array<i64: 24, 128>}, {pipeline_mode = #tpu.pipeline_mode<synchronous>, transform_indices = @transform_2, window_bounds = array<i64: 128, 256>}, {pipeline_mode = #tpu.pipeline_mode<synchronous>, transform_indices = @transform_3, window_bounds = array<i64: 1, 256>}, {pipeline_mode = #tpu.pipeline_mode<synchronous>, transform_indices = @transform_4, window_bounds = array<i64: 256, 128>}, {pipeline_mode = #tpu.pipeline_mode<synchronous>, transform_indices = @transform_5, window_bounds = array<i64: 1, 128>}, {pipeline_mode = #tpu.pipeline_mode<synchronous>, transform_indices = @transform_6, window_bounds = array<i64: 128, 128>}, {pipeline_mode = #tpu.pipeline_mode<synchronous>, transform_indices = @transform_7, window_bounds = array<i64: 1, 128>}, {transform_indices = @transform_8, window_bounds = array<i64: 24, 128>}]} {
    %c1_i32 = arith.constant 1 : i32
    %0 = arith.cmpi slt, %arg0, %c1_i32 : i32
    %1 = arith.extui %0 : i1 to i32
    %c0_i32 = arith.constant 0 : i32
    %2 = arith.cmpi ne, %1, %c0_i32 : i32
    scf.if %2 {
      %c0_15 = arith.constant 0 : index
      %c0_16 = arith.constant 0 : index
      %21 = vector.load %arg1[%c0_15, %c0_16] : memref<24x256xbf16, #tpu.memory_space<vmem>>, vector<24x256xbf16>
      %c0_17 = arith.constant 0 : index
      %c0_18 = arith.constant 0 : index
      %22 = vector.load %arg10[%c0_17, %c0_18] : memref<24x256xbf16, #tpu.memory_space<vmem>>, vector<24x256xbf16>
      tpu.vector_store %arg10[%c0_17, %c0_18], %21 {strides = array<i32>} : memref<24x256xbf16, #tpu.memory_space<vmem>>, vector<24x256xbf16>,
    } else {
    }
    %c1_i32_0 = arith.constant 1 : i32
    %3 = arith.cmpi sge, %arg0, %c1_i32_0 : i32
    %4 = arith.extui %3 : i1 to i32
    %c0_i32_1 = arith.constant 0 : i32
    %5 = arith.cmpi ne, %4, %c0_i32_1 : i32
    scf.if %5 {
      %c0_15 = arith.constant 0 : index
      %c0_16 = arith.constant 0 : index
      %21 = vector.load %arg2[%c0_15, %c0_16] : memref<24x128xbf16, #tpu.memory_space<vmem>>, vector<24x128xbf16>
      %c0_17 = arith.constant 0 : index
      %c0_18 = arith.constant 0 : index
      %22 = vector.load %arg3[%c0_17, %c0_18] : memref<128x256xbf16, #tpu.memory_space<vmem>>, vector<128x256xbf16>
      %cst_19 = arith.constant dense<0.000000e+00> : vector<24x256xf32>
      %23 = tpu.matmul %21, %22, %cst_19 {dimension_numbers = #tpu.dot_dimension_numbers<[1], [0], [0], [1], [0, 0, 1, 1], [], []>} : vector<24x128xbf16>, vector<128x256xbf16>, vector<24x256xf32> -> vector<24x256xf32>
      %c0_20 = arith.constant 0 : index
      %c0_21 = arith.constant 0 : index
      %24 = vector.load %arg4[%c0_20, %c0_21] : memref<1x256xf32, #tpu.memory_space<vmem>>, vector<1x256xf32>
      %25 = vector.broadcast %24 : vector<1x256xf32> to vector<24x256xf32>
      %26 = arith.addf %23, %25 : vector<24x256xf32>
      %27 = arith.truncf %26 : vector<24x256xf32> to vector<24x256xbf16>
      %c0_22 = arith.constant 0 : index
      %c0_23 = arith.constant 0 : index
      %28 = vector.load %arg10[%c0_22, %c0_23] : memref<24x256xbf16, #tpu.memory_space<vmem>>, vector<24x256xbf16>
      tpu.vector_store %arg10[%c0_22, %c0_23], %27 {strides = array<i32>} : memref<24x256xbf16, #tpu.memory_space<vmem>>, vector<24x256xbf16>,
    } else {
    }
    %c0 = arith.constant 0 : index
    %c0_2 = arith.constant 0 : index
    %6 = vector.load %arg10[%c0, %c0_2] : memref<24x256xbf16, #tpu.memory_space<vmem>>, vector<24x256xbf16>
    %c0_3 = arith.constant 0 : index
    %c0_4 = arith.constant 0 : index
    %7 = vector.load %arg5[%c0_3, %c0_4] : memref<256x128xbf16, #tpu.memory_space<vmem>>, vector<256x128xbf16>
    %cst = arith.constant dense<0.000000e+00> : vector<24x128xf32>
    %8 = tpu.matmul %6, %7, %cst {dimension_numbers = #tpu.dot_dimension_numbers<[1], [0], [0], [1], [0, 0, 1, 1], [], []>} : vector<24x256xbf16>, vector<256x128xbf16>, vector<24x128xf32> -> vector<24x128xf32>
    %c0_5 = arith.constant 0 : index
    %c0_6 = arith.constant 0 : index
    %9 = vector.load %arg6[%c0_5, %c0_6] : memref<1x128xf32, #tpu.memory_space<vmem>>, vector<1x128xf32>
    %10 = vector.broadcast %9 : vector<1x128xf32> to vector<24x128xf32>
    %11 = arith.addf %8, %10 : vector<24x128xf32>
    %cst_7 = arith.constant 0.000000e+00 : f32
    %12 = vector.broadcast %cst_7 : f32 to vector<24x128xf32>
    %13 = arith.maximumf %11, %12 : vector<24x128xf32>
    %14 = arith.truncf %13 : vector<24x128xf32> to vector<24x128xbf16>
    %c0_8 = arith.constant 0 : index
    %c0_9 = arith.constant 0 : index
    %15 = vector.load %arg7[%c0_8, %c0_9] : memref<128x128xbf16, #tpu.memory_space<vmem>>, vector<128x128xbf16>
    %cst_10 = arith.constant dense<0.000000e+00> : vector<24x128xf32>
    %16 = tpu.matmul %14, %15, %cst_10 {dimension_numbers = #tpu.dot_dimension_numbers<[1], [0], [0], [1], [0, 0, 1, 1], [], []>} : vector<24x128xbf16>, vector<128x128xbf16>, vector<24x128xf32> -> vector<24x128xf32>
    %c0_11 = arith.constant 0 : index
    %c0_12 = arith.constant 0 : index
    %17 = vector.load %arg8[%c0_11, %c0_12] : memref<1x128xf32, #tpu.memory_space<vmem>>, vector<1x128xf32>
    %18 = vector.broadcast %17 : vector<1x128xf32> to vector<24x128xf32>
    %19 = arith.addf %16, %18 : vector<24x128xf32>
    %c0_13 = arith.constant 0 : index
    %c0_14 = arith.constant 0 : index
    %20 = vector.load %arg9[%c0_13, %c0_14] : memref<24x128xf32, #tpu.memory_space<vmem>>, vector<24x128xf32>
    tpu.vector_store %arg9[%c0_13, %c0_14], %19 {strides = array<i32>} : memref<24x128xf32, #tpu.memory_space<vmem>>, vector<24x128xf32>,
    return
  }
  func.func @transform_0(%arg0: i32) -> (i32, i32) {
    %c0_i32 = arith.constant 0 : i32
    %0 = arith.minsi %arg0, %c0_i32 : i32
    %c0_i32_0 = arith.constant 0 : i32
    %c0_i32_1 = arith.constant 0 : i32
    return %0, %c0_i32_0 : i32, i32
  }
  func.func @transform_1(%arg0: i32) -> (i32, i32) {
    %c1_i32 = arith.constant 1 : i32
    %0 = arith.subi %arg0, %c1_i32 : i32
    %c0_i32 = arith.constant 0 : i32
    %1 = arith.maxsi %0, %c0_i32 : i32
    %c0_i32_0 = arith.constant 0 : i32
    %c0_i32_1 = arith.constant 0 : i32
    return %1, %c0_i32_0 : i32, i32
  }
  func.func @transform_2(%arg0: i32) -> (i32, i32) {
    %c0_i32 = arith.constant 0 : i32
    %c0_i32_0 = arith.constant 0 : i32
    %c0_i32_1 = arith.constant 0 : i32
    return %c0_i32, %c0_i32_0 : i32, i32
  }
  func.func @transform_3(%arg0: i32) -> (i32, i32) {
    %c0_i32 = arith.constant 0 : i32
    %c0_i32_0 = arith.constant 0 : i32
    %c0_i32_1 = arith.constant 0 : i32
    return %c0_i32, %c0_i32_0 : i32, i32
  }
  func.func @transform_4(%arg0: i32) -> (i32, i32) {
    %c0_i32 = arith.constant 0 : i32
    %c0_i32_0 = arith.constant 0 : i32
    %c0_i32_1 = arith.constant 0 : i32
    return %c0_i32, %c0_i32_0 : i32, i32
  }
  func.func @transform_5(%arg0: i32) -> (i32, i32) {
    %c0_i32 = arith.constant 0 : i32
    %c0_i32_0 = arith.constant 0 : i32
    %c0_i32_1 = arith.constant 0 : i32
    return %c0_i32, %c0_i32_0 : i32, i32
  }
  func.func @transform_6(%arg0: i32) -> (i32, i32) {
    %c0_i32 = arith.constant 0 : i32
    %c0_i32_0 = arith.constant 0 : i32
    %c0_i32_1 = arith.constant 0 : i32
    return %c0_i32, %c0_i32_0 : i32, i32
  }
  func.func @transform_7(%arg0: i32) -> (i32, i32) {
    %c0_i32 = arith.constant 0 : i32
    %c0_i32_0 = arith.constant 0 : i32
    %c0_i32_1 = arith.constant 0 : i32
    return %c0_i32, %c0_i32_0 : i32, i32
  }
  func.func @transform_8(%arg0: i32) -> (i32, i32) {
    %c0_i32 = arith.constant 0 : i32
    %c0_i32_0 = arith.constant 0 : i32
    return %arg0, %c0_i32 : i32, i32
  }
}

</mosaic_0001>

<llo_original>
// kernel: tpu_custom_call.1
$region0: #{tpu_custom_call.1}
  #allocation0 [shape = 'u32[]', space=smem, size = 0x4, offset = 0x4, fixed_abs, tag = 'smem constant byte address 0x4 - core index']
  #allocation1 [shape = 'u32[144,128]{1,0:T(1,128)}', space=vmem, size = 0x12000, scoped, tag = 'internal scratch']
  #allocation2 [shape = 'bf16[24,256]{1,0:T(8,128)(2,1)}', space=vmem, size = 0x3000, scoped, tag = 'scratch operand']
  %s0 = inlined_call_operand.hbm [shape: bf16[24,256], index: 0, kind: input, shape index: {}]
  %s1 = inlined_call_operand.hbm [shape: bf16[24,128], index: 1, kind: input, shape index: {}]
  %s2 = inlined_call_operand.hbm [shape: bf16[128,256], index: 2, kind: input, shape index: {}]
  %s3 = inlined_call_operand.vmem [shape: f32[1,256], index: 3, kind: input, shape index: {}]
  %s4 = inlined_call_operand.hbm [shape: bf16[256,128], index: 4, kind: input, shape index: {}]
  %s5 = inlined_call_operand.vmem [shape: f32[1,128], index: 5, kind: input, shape index: {}]
  %s6 = inlined_call_operand.hbm [shape: bf16[128,128], index: 6, kind: input, shape index: {}]
  %s7 = inlined_call_operand.vmem [shape: f32[1,128], index: 7, kind: input, shape index: {}]
  %s8 = inlined_call_operand.hbm [shape: f32[48,128], index: 8, kind: output, shape index: {}]
  %s9 = sld [smem:[#allocation0]]
  $region93: #{tpu_custom_call.1} parent=0
    _
  %s11 = ssub.s32 1, %s9
  %s12 = scalar_select 0, %s11, %s9
  $region1: #{tpu_custom_call.1} parent=0
    #allocation3 [shape = 'u8[24576]{0}', space=vmem, size = 0x6000, scoped, tag = 'input window, operand 0']
    #allocation4 [shape = 's32[2]{0}', space=sflag, size = 0x8, scoped, tag = 'scoped memory for tpu_custom_call.1']
    #allocation5 [shape = 's32[2]{0}', space=sflag, size = 0x8, scoped, tag = 'scoped memory for tpu_custom_call.1']
    #allocation6 [shape = 'u8[12288]{0}', space=vmem, size = 0x3000, scoped, tag = 'input window, operand 1']
    #allocation7 [shape = 's32[2]{0}', space=sflag, size = 0x8, scoped, tag = 'scoped memory for tpu_custom_call.1']
    #allocation8 [shape = 'u8[65536]{0}', space=vmem, size = 0x10000, scoped, tag = 'input window, operand 2, single buffered']
    #allocation9 [shape = 'u8[65536]{0}', space=vmem, size = 0x10000, scoped, tag = 'input window, operand 4, single buffered']
    #allocation10 [shape = 's32[1]{0}', space=sflag, size = 0x4, scoped, tag = 'scoped memory for tpu_custom_call.1']
    #allocation11 [shape = 'u8[32768]{0}', space=vmem, size = 0x8000, scoped, tag = 'input window, operand 6, single buffered']
    #allocation12 [shape = 'u8[24576]{0}', space=vmem, size = 0x6000, scoped, tag = 'output window, operand 0']
    %13 = vsyncpa [#allocation4], 0
    %s14 = scalar_lea.sflag [#allocation4], 1
    %15 = vsyncpa %s14, 0
    %16 = vsyncpa [#allocation7], 0
    %s17 = scalar_lea.sflag [#allocation7], 1
    %18 = vsyncpa %s17, 0
    %19 = vsyncpa [#allocation10], 0
    %20 = vsyncpa [#allocation5], 0
    %s21 = scalar_lea.sflag [#allocation5], 1
    %22 = vsyncpa %s21, 0
    loop: start=0, step=1, limit=4
    $region2: #{tpu_custom_call.1} parent=1 // loop_pre_header
      _
    $region3: #{tpu_custom_call.1} parent=1 // loop_header
      %s24 = sphi 0, %s28
      %p25 = scmp.ge.s32.totalorder %s24, 4
      %s38 = sphi 0, %s40
      %s41 = sphi 0, %s38
      %s42 = sphi 0, %s41
      %s58 = sphi 0, %s42
      %s70 = sphi 0, %s72
      %s73 = sphi 0, %s70
      %s74 = sphi 0, %s73
      %s90 = sphi 0, %s74
      %s94 = sphi 0, %s94
      %s96 = sphi 0, %s94
      %s97 = sphi 0, %s96
      %s111 = sphi 0, %s97
      %s115 = sphi 0, %s115
      %s117 = sphi 0, %s115
      %s118 = sphi 0, %s117
      %s132 = sphi 0, %s118
      %s136 = sphi 0, %s136
      %s138 = sphi 0, %s136
      %s139 = sphi 0, %s138
      %s153 = sphi 0, %s139
      %s157 = sphi 0, %s157
      %s159 = sphi 0, %s157
      %s160 = sphi 0, %s159
      %s174 = sphi 0, %s160
      %s178 = sphi 0, %s178
      %s180 = sphi 0, %s178
      %s181 = sphi 0, %s180
      %s195 = sphi 0, %s181
      %s199 = sphi 0, %s199
      %s201 = sphi 0, %s199
      %s202 = sphi 0, %s201
      %s216 = sphi 0, %s202
      %s222 = sphi 0, %s224
      %s225 = sphi 0, %s222
      %s226 = sphi 0, %s225
      %s242 = sphi 0, %s226
    $region4: #{tpu_custom_call.1} parent=1 // loop_header_branch
      %27 = sbr.rel (%p25) target = $region8
    $region5: #{tpu_custom_call.1} parent=1 // loop_body
      %s29 = ssub.s32 %s24, 1
      %s30 = ssub.s32 %s24, 2
      %s31 = sadd.s32 %s24, 1
      %p32 = scmp.lt.s32.totalorder %s24, 0
      %s33 = scalar_select %p32, %s24, 0
      %p34 = scmp.lt.s32.totalorder %s31, 0
      %s35 = scalar_select %p34, %s31, 0
      %s36 = ssub.s32 %s33, %s35
      %p37 = scmp.eq.s32.totalorder %s36, 0
      %s39 = sadd.s32 %s38, 1
      %s40 = scalar_select %p37, %s38, %s39
      %p43 = pneg %p37
      %p44 = scmp.eq.s32.totalorder %s24, 1
      %p45 = por %p43, %p44
      %p46 = scmp.ne.s32.totalorder %s38, %s41
      %p47 = scmp.eq.s32.totalorder %s24, 0
      %p48 = por %p46, %p47
      %p49 = scmp.ne.s32.totalorder %s38, %s41
      %p50 = scmp.eq.s32.totalorder %s29, 1
      %p51 = por %p49, %p50
      %p52 = scmp.ne.s32.totalorder %s41, %s42
      %p53 = scmp.eq.s32.totalorder %s29, 0
      %p54 = por %p52, %p53
      %p55 = scmp.ne.s32.totalorder %s41, %s42
      %p56 = scmp.eq.s32.totalorder %s30, 1
      %p57 = por %p55, %p56
      %p59 = scmp.ne.s32.totalorder %s42, %s58
      %p60 = scmp.eq.s32.totalorder %s30, 0
      %p61 = por %p59, %p60
      %s62 = ssub.s32 %s24, 1
      %p63 = scmp.gt.s32.totalorder %s62, 0
      %s64 = scalar_select %p63, %s62, 0
      %s65 = ssub.s32 %s31, 1
      %p66 = scmp.gt.s32.totalorder %s65, 0
      %s67 = scalar_select %p66, %s65, 0
      %s68 = ssub.s32 %s64, %s67
      %p69 = scmp.eq.s32.totalorder %s68, 0
      %s71 = sadd.s32 %s70, 1
      %s72 = scalar_select %p69, %s70, %s71
      %p75 = pneg %p69
      %p76 = scmp.eq.s32.totalorder %s24, 1
      %p77 = por %p75, %p76
      %p78 = scmp.ne.s32.totalorder %s70, %s73
      %p79 = scmp.eq.s32.totalorder %s24, 0
      %p80 = por %p78, %p79
      %p81 = scmp.ne.s32.totalorder %s70, %s73
      %p82 = scmp.eq.s32.totalorder %s29, 1
      %p83 = por %p81, %p82
      %p84 = scmp.ne.s32.totalorder %s73, %s74
      %p85 = scmp.eq.s32.totalorder %s29, 0
      %p86 = por %p84, %p85
      %p87 = scmp.ne.s32.totalorder %s73, %s74
      %p88 = scmp.eq.s32.totalorder %s30, 1
      %p89 = por %p87, %p88
      %p91 = scmp.ne.s32.totalorder %s74, %s90
      %p92 = scmp.eq.s32.totalorder %s30, 0
      %p93 = por %p91, %p92
      %s95 = sadd.s32 %s94, 1
      %p98 = scmp.eq.s32.totalorder %s24, 1
      %p99 = scmp.ne.s32.totalorder %s94, %s96
      %p100 = scmp.eq.s32.totalorder %s24, 0
      %p101 = por %p99, %p100
      %p102 = scmp.ne.s32.totalorder %s94, %s96
      %p103 = scmp.eq.s32.totalorder %s29, 1
      %p104 = por %p102, %p103
      %p105 = scmp.ne.s32.totalorder %s96, %s97
      %p106 = scmp.eq.s32.totalorder %s29, 0
      %p107 = por %p105, %p106
      %p108 = scmp.ne.s32.totalorder %s96, %s97
      %p109 = scmp.eq.s32.totalorder %s30, 1
      %p110 = por %p108, %p109
      %p112 = scmp.ne.s32.totalorder %s97, %s111
      %p113 = scmp.eq.s32.totalorder %s30, 0
      %p114 = por %p112, %p113
      %s116 = sadd.s32 %s115, 1
      %p119 = scmp.eq.s32.totalorder %s24, 1
      %p120 = scmp.ne.s32.totalorder %s115, %s117
      %p121 = scmp.eq.s32.totalorder %s24, 0
      %p122 = por %p120, %p121
      %p123 = scmp.ne.s32.totalorder %s115, %s117
      %p124 = scmp.eq.s32.totalorder %s29, 1
      %p125 = por %p123, %p124
      %p126 = scmp.ne.s32.totalorder %s117, %s118
      %p127 = scmp.eq.s32.totalorder %s29, 0
      %p128 = por %p126, %p127
      %p129 = scmp.ne.s32.totalorder %s117, %s118
      %p130 = scmp.eq.s32.totalorder %s30, 1
      %p131 = por %p129, %p130
      %p133 = scmp.ne.s32.totalorder %s118, %s132
      %p134 = scmp.eq.s32.totalorder %s30, 0
      %p135 = por %p133, %p134
      %s137 = sadd.s32 %s136, 1
      %p140 = scmp.eq.s32.totalorder %s24, 1
      %p141 = scmp.ne.s32.totalorder %s136, %s138
      %p142 = scmp.eq.s32.totalorder %s24, 0
      %p143 = por %p141, %p142
      %p144 = scmp.ne.s32.totalorder %s136, %s138
      %p145 = scmp.eq.s32.totalorder %s29, 1
      %p146 = por %p144, %p145
      %p147 = scmp.ne.s32.totalorder %s138, %s139
      %p148 = scmp.eq.s32.totalorder %s29, 0
      %p149 = por %p147, %p148
      %p150 = scmp.ne.s32.totalorder %s138, %s139
      %p151 = scmp.eq.s32.totalorder %s30, 1
      %p152 = por %p150, %p151
      %p154 = scmp.ne.s32.totalorder %s139, %s153
      %p155 = scmp.eq.s32.totalorder %s30, 0
      %p156 = por %p154, %p155
      %s158 = sadd.s32 %s157, 1
      %p161 = scmp.eq.s32.totalorder %s24, 1
      %p162 = scmp.ne.s32.totalorder %s157, %s159
      %p163 = scmp.eq.s32.totalorder %s24, 0
      %p164 = por %p162, %p163
      %p165 = scmp.ne.s32.totalorder %s157, %s159
      %p166 = scmp.eq.s32.totalorder %s29, 1
      %p167 = por %p165, %p166
      %p168 = scmp.ne.s32.totalorder %s159, %s160
      %p169 = scmp.eq.s32.totalorder %s29, 0
      %p170 = por %p168, %p169
      %p171 = scmp.ne.s32.totalorder %s159, %s160
      %p172 = scmp.eq.s32.totalorder %s30, 1
      %p173 = por %p171, %p172
      %p175 = scmp.ne.s32.totalorder %s160, %s174
      %p176 = scmp.eq.s32.totalorder %s30, 0
      %p177 = por %p175, %p176
      %s179 = sadd.s32 %s178, 1
      %p182 = scmp.eq.s32.totalorder %s24, 1
      %p183 = scmp.ne.s32.totalorder %s178, %s180
      %p184 = scmp.eq.s32.totalorder %s24, 0
      %p185 = por %p183, %p184
      %p186 = scmp.ne.s32.totalorder %s178, %s180
      %p187 = scmp.eq.s32.totalorder %s29, 1
      %p188 = por %p186, %p187
      %p189 = scmp.ne.s32.totalorder %s180, %s181
      %p190 = scmp.eq.s32.totalorder %s29, 0
      %p191 = por %p189, %p190
      %p192 = scmp.ne.s32.totalorder %s180, %s181
      %p193 = scmp.eq.s32.totalorder %s30, 1
      %p194 = por %p192, %p193
      %p196 = scmp.ne.s32.totalorder %s181, %s195
      %p197 = scmp.eq.s32.totalorder %s30, 0
      %p198 = por %p196, %p197
      %s200 = sadd.s32 %s199, 1
      %p203 = scmp.eq.s32.totalorder %s24, 1
      %p204 = scmp.ne.s32.totalorder %s199, %s201
      %p205 = scmp.eq.s32.totalorder %s24, 0
      %p206 = por %p204, %p205
      %p207 = scmp.ne.s32.totalorder %s199, %s201
      %p208 = scmp.eq.s32.totalorder %s29, 1
      %p209 = por %p207, %p208
      %p210 = scmp.ne.s32.totalorder %s201, %s202
      %p211 = scmp.eq.s32.totalorder %s29, 0
      %p212 = por %p210, %p211
      %p213 = scmp.ne.s32.totalorder %s201, %s202
      %p214 = scmp.eq.s32.totalorder %s30, 1
      %p215 = por %p213, %p214
      %p217 = scmp.ne.s32.totalorder %s202, %s216
      %p218 = scmp.eq.s32.totalorder %s30, 0
      %p219 = por %p217, %p218
      %s220 = ssub.s32 %s24, %s31
      %p221 = scmp.eq.s32.totalorder %s220, 0
      %s223 = sadd.s32 %s222, 1
      %s224 = scalar_select %p221, %s222, %s223
      %p227 = pneg %p221
      %p228 = scmp.eq.s32.totalorder %s24, 1
      %p229 = por %p227, %p228
      %p230 = scmp.ne.s32.totalorder %s222, %s225
      %p231 = scmp.eq.s32.totalorder %s24, 0
      %p232 = por %p230, %p231
      %p233 = scmp.ne.s32.totalorder %s222, %s225
      %p234 = scmp.eq.s32.totalorder %s29, 1
      %p235 = por %p233, %p234
      %p236 = scmp.ne.s32.totalorder %s225, %s226
      %p237 = scmp.eq.s32.totalorder %s29, 0
      %p238 = por %p236, %p237
      %p239 = scmp.ne.s32.totalorder %s225, %s226
      %p240 = scmp.eq.s32.totalorder %s30, 1
      %p241 = por %p239, %p240
      %p243 = scmp.ne.s32.totalorder %s226, %s242
      %p244 = scmp.eq.s32.totalorder %s30, 0
      %p245 = por %p243, %p244
      %p246 = scmp.le.s32.totalorder 1, %s24
      %p247 = scmp.lt.s32.totalorder %s24, 3
      %p248 = pnand %p246, %p247
      %p249 = pneg %p248
      // Predicated region
      $region9: #{tpu_custom_call.1} parent=5 // pred_check
        _
      $region10: #{tpu_custom_call.1} parent=5 // pred_check_branch
        %251 = sbr.rel (%p248) target = $region12
      $region11: #{tpu_custom_call.1} parent=5 // pred_region
        %s252 = ssub.s32 %s24, 1
        // Predicated region
        $region13: #{tpu_custom_call.1} parent=11 // pred_check
          %p253 = pneg %p107
        $region14: #{tpu_custom_call.1} parent=11 // pred_check_branch
          %255 = sbr.rel (%p253) target = $region16
        $region15: #{tpu_custom_call.1} parent=11 // pred_region
          %s257 = ssub.s32 2048, 2048
          %258 = vsyncadd [#allocation7], %s257
          %s259 = sshll.u32 [#allocation8], 4
          %s260 = int_to_ptr.vmem [resolvable:$true] %s259
          %265 = dma.hbm_to_vmem [thread:$0]  %s2, 2048, %s260, [#allocation7], 128, 128, 8
        $region16: #{tpu_custom_call.1} parent=11 // pred_fallthru
          _
        // Predicated region
        $region17: #{tpu_custom_call.1} parent=11 // pred_check
          %p266 = pneg %p128
        $region18: #{tpu_custom_call.1} parent=11 // pred_check_branch
          %268 = sbr.rel (%p266) target = $region20
        $region19: #{tpu_custom_call.1} parent=11 // pred_region
          _
        $region20: #{tpu_custom_call.1} parent=11 // pred_fallthru
          _
        // Predicated region
        $region21: #{tpu_custom_call.1} parent=11 // pred_check
          %p269 = pneg %p149
        $region22: #{tpu_custom_call.1} parent=11 // pred_check_branch
          %271 = sbr.rel (%p269) target = $region24
        $region23: #{tpu_custom_call.1} parent=11 // pred_region
          %s273 = ssub.s32 2048, 2048
          %274 = vsyncadd [#allocation10], %s273
          %s275 = sshll.u32 [#allocation9], 4
          %s276 = int_to_ptr.vmem [resolvable:$true] %s275
          %281 = dma.hbm_to_vmem [thread:$0]  %s4, 2048, %s276, [#allocation10], 64, 64, 4
        $region24: #{tpu_custom_call.1} parent=11 // pred_fallthru
          _
        // Predicated region
        $region25: #{tpu_custom_call.1} parent=11 // pred_check
          %p282 = pneg %p170
        $region26: #{tpu_custom_call.1} parent=11 // pred_check_branch
          %284 = sbr.rel (%p282) target = $region28
        $region27: #{tpu_custom_call.1} parent=11 // pred_region
          _
        $region28: #{tpu_custom_call.1} parent=11 // pred_fallthru
          _
        // Predicated region
        $region29: #{tpu_custom_call.1} parent=11 // pred_check
          %p285 = pneg %p191
        $region30: #{tpu_custom_call.1} parent=11 // pred_check_branch
          %287 = sbr.rel (%p285) target = $region32
        $region31: #{tpu_custom_call.1} parent=11 // pred_region
          %s289 = ssub.s32 1024, 1024
          %290 = vsyncadd [#allocation10], %s289
          %s291 = sshll.u32 [#allocation11], 4
          %s292 = int_to_ptr.vmem [resolvable:$true] %s291
          %297 = dma.hbm_to_vmem [thread:$0]  %s6, 1024, %s292, [#allocation10], 64, 64, 4
        $region32: #{tpu_custom_call.1} parent=11 // pred_fallthru
          _
        // Predicated region
        $region33: #{tpu_custom_call.1} parent=11 // pred_check
          %p298 = pneg %p212
        $region34: #{tpu_custom_call.1} parent=11 // pred_check_branch
          %300 = sbr.rel (%p298) target = $region36
        $region35: #{tpu_custom_call.1} parent=11 // pred_region
          _
        $region36: #{tpu_custom_call.1} parent=11 // pred_fallthru
          _
      $region12: #{tpu_custom_call.1} parent=5 // pred_fallthru
        _
      %p301 = scmp.lt.s32.totalorder %s24, 2
      // Predicated region
      $region37: #{tpu_custom_call.1} parent=5 // pred_check
        %p302 = pneg %p301
      $region38: #{tpu_custom_call.1} parent=5 // pred_check_branch
        %304 = sbr.rel (%p302) target = $region40
      $region39: #{tpu_custom_call.1} parent=5 // pred_region
        // Predicated region
        $region41: #{tpu_custom_call.1} parent=39 // pred_check
          %p305 = pneg %p48
        $region42: #{tpu_custom_call.1} parent=39 // pred_check_branch
          %307 = sbr.rel (%p305) target = $region44
        $region43: #{tpu_custom_call.1} parent=39 // pred_region
          %s308 = sand.u32 %s38, 1
          %s309 = scalar_lea.sflag [#allocation4], %s308
          %s310 = sand.u32 %s38, 1
          %s311 = smul.addr %s310, 24
          %s312 = scalar_lea.vmem [#allocation3], %s311
          %p313 = scmp.lt.s32.totalorder %s24, 0
          %s314 = scalar_select %p313, %s24, 0
          %s315 = smul.u32 3, %s314
          %s317 = ssub.s32 384, 384
          %318 = vsyncadd %s309, %s317
          %s319 = smul.addr %s315, 2
          %s320 = smul.addr %s319, 64
          %s321 = scalar_lea.hbm %s0, %s320
          %s322 = sshll.u32 %s312, 4
          %s323 = int_to_ptr.vmem [resolvable:$true] %s322
          %328 = dma.hbm_to_vmem [thread:$0]  %s321, 384, %s323, %s309, 128, 128, 8
        $region44: #{tpu_custom_call.1} parent=39 // pred_fallthru
          _
        // Predicated region
        $region45: #{tpu_custom_call.1} parent=39 // pred_check
          %p329 = pneg %p80
        $region46: #{tpu_custom_call.1} parent=39 // pred_check_branch
          %331 = sbr.rel (%p329) target = $region48
        $region47: #{tpu_custom_call.1} parent=39 // pred_region
          %s332 = sand.u32 %s24, 1
          %s333 = scalar_lea.sflag [#allocation7], %s332
          %s334 = sand.u32 %s70, 1
          %s335 = smul.addr %s334, 12
          %s336 = scalar_lea.vmem [#allocation6], %s335
          %s337 = ssub.s32 %s24, 1
          %p338 = scmp.gt.s32.totalorder %s337, 0
          %s339 = scalar_select %p338, %s337, 0
          %s340 = smul.u32 3, %s339
          %s342 = ssub.s32 192, 192
          %343 = vsyncadd %s333, %s342
          %s344 = smul.addr %s340, 64
          %s345 = scalar_lea.hbm %s1, %s344
          %s346 = sshll.u32 %s336, 4
          %s347 = int_to_ptr.vmem [resolvable:$true] %s346
          %352 = dma.hbm_to_vmem [thread:$0]  %s345, 192, %s347, %s333, 64, 64, 4
        $region48: #{tpu_custom_call.1} parent=39 // pred_fallthru
          _
      $region40: #{tpu_custom_call.1} parent=5 // pred_fallthru
        _
      %p353 = scmp.le.s32.totalorder 1, %s24
      %p354 = scmp.lt.s32.totalorder %s24, 3
      %p355 = pnand %p353, %p354
      %p356 = pneg %p355
      // Predicated region
      $region49: #{tpu_custom_call.1} parent=5 // pred_check
        _
      $region50: #{tpu_custom_call.1} parent=5 // pred_check_branch
        %358 = sbr.rel (%p355) target = $region52
      $region51: #{tpu_custom_call.1} parent=5 // pred_region
        %s359 = ssub.s32 %s24, 1
        %s360 = sand.u32 %s41, 1
        %s361 = scalar_lea.sflag [#allocation4], %s360
        %s362 = sand.u32 %s41, 1
        %s363 = smul.addr %s362, 24
        %s364 = scalar_lea.vmem [#allocation3], %s363
        // Predicated region
        $region53: #{tpu_custom_call.1} parent=51 // pred_check
          %p365 = pneg %p54
        $region54: #{tpu_custom_call.1} parent=51 // pred_check_branch
          %367 = sbr.rel (%p365) target = $region56
        $region55: #{tpu_custom_call.1} parent=51 // pred_region
          %368 = dma.done %s361, 384
        $region56: #{tpu_custom_call.1} parent=51 // pred_fallthru
          _
        %s369 = sand.u32 %s29, 1
        %s370 = scalar_lea.sflag [#allocation7], %s369
        %s371 = sand.u32 %s73, 1
        %s372 = smul.addr %s371, 12
        %s373 = scalar_lea.vmem [#allocation6], %s372
        // Predicated region
        $region57: #{tpu_custom_call.1} parent=51 // pred_check
          %p374 = pneg %p86
        $region58: #{tpu_custom_call.1} parent=51 // pred_check_branch
          %376 = sbr.rel (%p374) target = $region60
        $region59: #{tpu_custom_call.1} parent=51 // pred_region
          %377 = dma.done %s370, 192
        $region60: #{tpu_custom_call.1} parent=51 // pred_fallthru
          _
        // Predicated region
        $region61: #{tpu_custom_call.1} parent=51 // pred_check
          %p378 = pneg %p107
        $region62: #{tpu_custom_call.1} parent=51 // pred_check_branch
          %380 = sbr.rel (%p378) target = $region64
        $region63: #{tpu_custom_call.1} parent=51 // pred_region
          %381 = dma.done [#allocation7], 2048
        $region64: #{tpu_custom_call.1} parent=51 // pred_fallthru
          _
        // Predicated region
        $region65: #{tpu_custom_call.1} parent=51 // pred_check
          %p382 = pneg %p149
        $region66: #{tpu_custom_call.1} parent=51 // pred_check_branch
          %384 = sbr.rel (%p382) target = $region68
        $region67: #{tpu_custom_call.1} parent=51 // pred_region
          %385 = dma.done [#allocation10], 2048
        $region68: #{tpu_custom_call.1} parent=51 // pred_fallthru
          _
        // Predicated region
        $region69: #{tpu_custom_call.1} parent=51 // pred_check
          %p386 = pneg %p191
        $region70: #{tpu_custom_call.1} parent=51 // pred_check_branch
          %388 = sbr.rel (%p386) target = $region72
        $region71: #{tpu_custom_call.1} parent=51 // pred_region
          %389 = dma.done [#allocation10], 1024
        $region72: #{tpu_custom_call.1} parent=51 // pred_fallthru
          _
        %s390 = sand.u32 %s41, 1
        %s391 = scalar_lea.sflag [#allocation4], %s390
        %s392 = sand.u32 %s41, 1
        %s393 = smul.addr %s392, 24
        %s394 = scalar_lea.vmem [#allocation3], %s393
        %p395 = pneg %p54
        %p396 = pneg %p51
        %s397 = sand.u32 %s29, 1
        %s398 = scalar_lea.sflag [#allocation7], %s397
        %s399 = sand.u32 %s73, 1
        %s400 = smul.addr %s399, 12
        %s401 = scalar_lea.vmem [#allocation6], %s400
        %p402 = pneg %p86
        %p403 = pneg %p83
        %p404 = pneg %p107
        %p405 = pneg %p104
        %p406 = pneg %p128
        %p407 = pneg %p125
        %p408 = pneg %p149
        %p409 = pneg %p146
        %p410 = pneg %p170
        %p411 = pneg %p167
        %p412 = pneg %p191
        %p413 = pneg %p188
        %p414 = pneg %p212
        %p415 = pneg %p209
        %p416 = pneg %p238
        %p417 = pneg %p235
        %s418 = sand.u32 %s225, 1
        %s419 = scalar_lea.sflag [#allocation5], %s418
        %s420 = sand.u32 %s225, 1
        %s421 = smul.addr %s420, 24
        %s422 = scalar_lea.vmem [#allocation12], %s421
        %p423 = scmp.lt.s32.totalorder %s29, 0
        %s424 = scalar_select %p423, %s29, 0
        %s425 = smul.u32 3, %s424
        %s426 = ssub.s32 %s29, 1
        %p427 = scmp.gt.s32.totalorder %s426, 0
        %s428 = scalar_select %p427, %s426, 0
        %s429 = smul.u32 3, %s428
        %s430 = smul.u32 3, %s29
        %p432 = scmp.lt.s32.totalorder %s29, 1
        // Predicated region
        $region73: #{tpu_custom_call.1} parent=51 // pred_check
          %p433 = pneg %p432
        $region74: #{tpu_custom_call.1} parent=51 // pred_check_branch
          %435 = sbr.rel (%p433) target = $region76
        $region75: #{tpu_custom_call.1} parent=51 // pred_region
          %v436 = vld [vmem:[%s364] sm:$0xff]
          %v437 = vld [vmem:[%s364 + $0x8] sm:$0xff]
          %v438 = vld [vmem:[%s364 + $0x10] sm:$0xff]
          %439 = vst [vmem:[#allocation2] sm:$0xff] %v436
          %440 = vst [vmem:[#allocation2 + $0x8] sm:$0xff] %v437
          %441 = vst [vmem:[#allocation2 + $0x10] sm:$0xff] %v438
        $region76: #{tpu_custom_call.1} parent=51 // pred_fallthru
          _
        %p442 = scmp.ge.s32.totalorder %s29, 1
        // Predicated region
        $region77: #{tpu_custom_call.1} parent=51 // pred_check
          %p443 = pneg %p442
        $region78: #{tpu_custom_call.1} parent=51 // pred_check_branch
          %445 = sbr.rel (%p443) target = $region80
        $region79: #{tpu_custom_call.1} parent=51 // pred_region
          %v446 = vld [vmem:[%s373] sm:$0xf]
          %v447 = vld [vmem:[%s373 + $0x4] sm:$0xf]
          %v448 = vld [vmem:[%s373 + $0x8] sm:$0xf]
          %v449 = vld [vmem:[#allocation8] sm:$0xff]
          %v450 = vld [vmem:[#allocation8 + $0x8] sm:$0xff]
          %v451 = vld [vmem:[#allocation8 + $0x10] sm:$0xff]
          %v452 = vld [vmem:[#allocation8 + $0x18] sm:$0xff]
          %v453 = vld [vmem:[#allocation8 + $0x20] sm:$0xff]
          %v454 = vld [vmem:[#allocation8 + $0x28] sm:$0xff]
          %v455 = vld [vmem:[#allocation8 + $0x30] sm:$0xff]
          %v456 = vld [vmem:[#allocation8 + $0x38] sm:$0xff]
          %v457 = vld [vmem:[#allocation8 + $0x40] sm:$0xff]
          %v458 = vld [vmem:[#allocation8 + $0x48] sm:$0xff]
          %v459 = vld [vmem:[#allocation8 + $0x50] sm:$0xff]
          %v460 = vld [vmem:[#allocation8 + $0x58] sm:$0xff]
          %v461 = vld [vmem:[#allocation8 + $0x60] sm:$0xff]
          %v462 = vld [vmem:[#allocation8 + $0x68] sm:$0xff]
          %v463 = vld [vmem:[#allocation8 + $0x70] sm:$0xff]
          %v464 = vld [vmem:[#allocation8 + $0x78] sm:$0xff]
          %v465 = vld [vmem:[%s3] sm:$0x3]
          %v467 = vlaneseq
          %v468 = vshrl.u32 %v467, 7
          %v469 = vsub.s32 0, %v468
          %v470 = vrot.slane %v465, %v469
          %v471 = vlaneseq
          %v472 = vshrl.u32 %v471, 7
          %v473 = vsub.s32 1, %v472
          %v474 = vrot.slane %v465, %v473
          %v480 = vunpack.c.l.b16 %v446
          %v481 = vunpack.c.l.b16 %v447
          %v482 = vunpack.c.l.b16 %v448
          %v483 = vpack.c.b16 %v481, %v480
          %v484 = vpack.c.b16 %v482, %v482
          %v503 = vunpack.c.l.b16 %v449
          %v504 = vunpack.c.h.b16 %v449
          %v505 = vunpack.c.l.b16 %v450
          %v506 = vunpack.c.h.b16 %v450
          %v507 = vunpack.c.l.b16 %v451
          %v508 = vunpack.c.h.b16 %v451
          %v509 = vunpack.c.l.b16 %v452
          %v510 = vunpack.c.h.b16 %v452
          %v511 = vunpack.c.l.b16 %v453
          %v512 = vunpack.c.h.b16 %v453
          %v513 = vunpack.c.l.b16 %v454
          %v514 = vunpack.c.h.b16 %v454
          %v515 = vunpack.c.l.b16 %v455
          %v516 = vunpack.c.h.b16 %v455
          %v517 = vunpack.c.l.b16 %v456
          %v518 = vunpack.c.h.b16 %v456
          %v519 = vunpack.c.l.b16 %v457
          %v520 = vunpack.c.h.b16 %v457
          %v521 = vunpack.c.l.b16 %v458
          %v522 = vunpack.c.h.b16 %v458
          %v523 = vunpack.c.l.b16 %v459
          %v524 = vunpack.c.h.b16 %v459
          %v525 = vunpack.c.l.b16 %v460
          %v526 = vunpack.c.h.b16 %v460
          %v527 = vunpack.c.l.b16 %v461
          %v528 = vunpack.c.h.b16 %v461
          %v529 = vunpack.c.l.b16 %v462
          %v530 = vunpack.c.h.b16 %v462
          %v531 = vunpack.c.l.b16 %v463
          %v532 = vunpack.c.h.b16 %v463
          %v533 = vunpack.c.l.b16 %v464
          %v534 = vunpack.c.h.b16 %v464
          %v535 = vpack.c.b16 %v505, %v503
          %v536 = vpack.c.b16 %v506, %v504
          %v537 = vpack.c.b16 %v509, %v507
          %v538 = vpack.c.b16 %v510, %v508
          %v539 = vpack.c.b16 %v513, %v511
          %v540 = vpack.c.b16 %v514, %v512
          %v541 = vpack.c.b16 %v517, %v515
          %v542 = vpack.c.b16 %v518, %v516
          %v543 = vpack.c.b16 %v521, %v519
          %v544 = vpack.c.b16 %v522, %v520
          %v545 = vpack.c.b16 %v525, %v523
          %v546 = vpack.c.b16 %v526, %v524
          %v547 = vpack.c.b16 %v529, %v527
          %v548 = vpack.c.b16 %v530, %v528
          %v549 = vpack.c.b16 %v533, %v531
          %v550 = vpack.c.b16 %v534, %v532
          %567 = vmatprep.subr.bf16.mxu0 %v550
          %568 = vmatpush1.bf16.msra.mxu0 %v549
          %569 = vmatprep.subr.bf16.mxu0 %v548
          %570 = vmatpush1.bf16.msra.mxu0 %v547
          %571 = vmatprep.subr.bf16.mxu0 %v546
          %572 = vmatpush1.bf16.msra.mxu0 %v545
          %573 = vmatprep.subr.bf16.mxu0 %v544
          %574 = vmatpush1.bf16.msra.mxu0 %v543
          %575 = vmatprep.subr.bf16.mxu0 %v542
          %576 = vmatpush1.bf16.msra.mxu0 %v541
          %577 = vmatprep.subr.bf16.mxu0 %v540
          %578 = vmatpush1.bf16.msra.mxu0 %v539
          %579 = vmatprep.subr.bf16.mxu0 %v538
          %580 = vmatpush1.bf16.msra.mxu0 %v537
          %581 = vmatprep.subr.bf16.mxu0 %v536
          %582 = vmatpush1.bf16.msra.mxu0 %v535
          %583 = vmatprep.subr.bf16.mxu0 0
          %584 = vmatpush2.bf16.msra.mxu0 0
          %585 = vmatprep.subr.bf16.mxu0 0
          %586 = vmatpush2.bf16.msra.mxu0 0
          %587 = vmatprep.subr.bf16.mxu0 0
          %588 = vmatpush2.bf16.msra.mxu0 0
          %589 = vmatprep.subr.bf16.mxu0 0
          %590 = vmatpush2.bf16.msra.mxu0 0
          %591 = vmatprep.subr.bf16.mxu0 0
          %592 = vmatpush2.bf16.msra.mxu0 0
          %593 = vmatprep.subr.bf16.mxu0 0
          %594 = vmatpush2.bf16.msra.mxu0 0
          %595 = vmatprep.subr.bf16.mxu0 0
          %596 = vmatpush2.bf16.msra.mxu0 0
          %597 = vmatprep.subr.bf16.mxu0 0
          %598 = vmatpush2.bf16.msra.mxu0 0
          %599 = vmatprep.mubr.bf16.mxu0 0
          %600 = vmatmul.mubr.bf16.gmra.mxu0 %v483
          %v601 = vpop.f32.mrf.mxu0
          %v602 = vadd.f32 %v470, %v601
          %v603 = vpop.f32.mrf.mxu0
          %v604 = vadd.f32 %v474, %v603
          %v605 = vpop.f32.mrf.mxu0
          %v606 = vadd.f32 %v470, %v605
          %v607 = vpop.f32.mrf.mxu0
          %v608 = vadd.f32 %v474, %v607
          %609 = vmatprep.mubr.bf16.mxu0 0
          %610 = vmatmul.mubr.bf16.gmra.mxu0 %v484
          %v611 = vpop.f32.mrf.mxu0
          %v612 = vadd.f32 %v470, %v611
          %v613 = vpop.f32.mrf.mxu0
          %v614 = vadd.f32 %v474, %v613
          %v615 = vpop.f32.mrf.mxu0
          %v616 = vpop.f32.mrf.mxu0
          %617 = vdwg.mxu0
          %v618 = vpack.c.bf16 %v606, %v602
          %v619 = vpack.c.bf16 %v608, %v604
          %v620 = vpack.c.bf16 %v612, %v612
          %v621 = vpack.c.bf16 %v614, %v614
          %v626 = vunpack.c.l.b16 %v618
          %v627 = vunpack.c.l.b16 %v619
          %v628 = vunpack.c.h.b16 %v618
          %v629 = vunpack.c.h.b16 %v619
          %v630 = vunpack.c.l.b16 %v620
          %v631 = vunpack.c.l.b16 %v621
          %v632 = vpack.c.b16 %v627, %v626
          %v633 = vpack.c.b16 %v629, %v628
          %v634 = vpack.c.b16 %v631, %v630
          %638 = vst [vmem:[#allocation2] sm:$0xff] %v632
          %639 = vst [vmem:[#allocation2 + $0x8] sm:$0xff] %v633
          %640 = vst [vmem:[#allocation2 + $0x10] sm:$0xff] %v634
        $region80: #{tpu_custom_call.1} parent=51 // pred_fallthru
          _
        %v641 = vld [vmem:[#allocation2] sm:$0xff]
        %v642 = vld [vmem:[#allocation2 + $0x8] sm:$0xff]
        %v643 = vld [vmem:[#allocation2 + $0x10] sm:$0xff]
        %v644 = vld [vmem:[#allocation9] sm:$0xf]
        %v645 = vld [vmem:[#allocation9 + $0x4] sm:$0xf]
        %v646 = vld [vmem:[#allocation9 + $0x8] sm:$0xf]
        %v647 = vld [vmem:[#allocation9 + $0xc] sm:$0xf]
        %v648 = vld [vmem:[#allocation9 + $0x10] sm:$0xf]
        %v649 = vld [vmem:[#allocation9 + $0x14] sm:$0xf]
        %v650 = vld [vmem:[#allocation9 + $0x18] sm:$0xf]
        %v651 = vld [vmem:[#allocation9 + $0x1c] sm:$0xf]
        %v652 = vld [vmem:[#allocation9 + $0x20] sm:$0xf]
        %v653 = vld [vmem:[#allocation9 + $0x24] sm:$0xf]
        %v654 = vld [vmem:[#allocation9 + $0x28] sm:$0xf]
        %v655 = vld [vmem:[#allocation9 + $0x2c] sm:$0xf]
        %v656 = vld [vmem:[#allocation9 + $0x30] sm:$0xf]
        %v657 = vld [vmem:[#allocation9 + $0x34] sm:$0xf]
        %v658 = vld [vmem:[#allocation9 + $0x38] sm:$0xf]
        %v659 = vld [vmem:[#allocation9 + $0x3c] sm:$0xf]
        %v660 = vld [vmem:[#allocation9 + $0x40] sm:$0xf]
        %v661 = vld [vmem:[#allocation9 + $0x44] sm:$0xf]
        %v662 = vld [vmem:[#allocation9 + $0x48] sm:$0xf]
        %v663 = vld [vmem:[#allocation9 + $0x4c] sm:$0xf]
        %v664 = vld [vmem:[#allocation9 + $0x50] sm:$0xf]
        %v665 = vld [vmem:[#allocation9 + $0x54] sm:$0xf]
        %v666 = vld [vmem:[#allocation9 + $0x58] sm:$0xf]
        %v667 = vld [vmem:[#allocation9 + $0x5c] sm:$0xf]
        %v668 = vld [vmem:[#allocation9 + $0x60] sm:$0xf]
        %v669 = vld [vmem:[#allocation9 + $0x64] sm:$0xf]
        %v670 = vld [vmem:[#allocation9 + $0x68] sm:$0xf]
        %v671 = vld [vmem:[#allocation9 + $0x6c] sm:$0xf]
        %v672 = vld [vmem:[#allocation9 + $0x70] sm:$0xf]
        %v673 = vld [vmem:[#allocation9 + $0x74] sm:$0xf]
        %v674 = vld [vmem:[#allocation9 + $0x78] sm:$0xf]
        %v675 = vld [vmem:[#allocation9 + $0x7c] sm:$0xf]
        %v676 = vld [vmem:[%s5] sm:$0x1]
        %v678 = vlaneseq
        %v679 = vshrl.u32 %v678, 7
        %v680 = vsub.s32 0, %v679
        %v681 = vrot.slane %v676, %v680
        %v686 = vunpack.c.l.b16 %v641
        %v687 = vunpack.c.h.b16 %v641
        %v688 = vunpack.c.l.b16 %v642
        %v689 = vunpack.c.h.b16 %v642
        %v690 = vunpack.c.l.b16 %v643
        %v691 = vunpack.c.h.b16 %v643
        %v692 = vpack.c.b16 %v688, %v686
        %v693 = vpack.c.b16 %v689, %v687
        %v694 = vpack.c.b16 %v690, %v690
        %v695 = vpack.c.b16 %v691, %v691
        %v732 = vunpack.c.l.b16 %v644
        %v733 = vunpack.c.l.b16 %v645
        %v734 = vunpack.c.l.b16 %v646
        %v735 = vunpack.c.l.b16 %v647
        %v736 = vunpack.c.l.b16 %v648
        %v737 = vunpack.c.l.b16 %v649
        %v738 = vunpack.c.l.b16 %v650
        %v739 = vunpack.c.l.b16 %v651
        %v740 = vunpack.c.l.b16 %v652
        %v741 = vunpack.c.l.b16 %v653
        %v742 = vunpack.c.l.b16 %v654
        %v743 = vunpack.c.l.b16 %v655
        %v744 = vunpack.c.l.b16 %v656
        %v745 = vunpack.c.l.b16 %v657
        %v746 = vunpack.c.l.b16 %v658
        %v747 = vunpack.c.l.b16 %v659
        %v748 = vunpack.c.l.b16 %v660
        %v749 = vunpack.c.l.b16 %v661
        %v750 = vunpack.c.l.b16 %v662
        %v751 = vunpack.c.l.b16 %v663
        %v752 = vunpack.c.l.b16 %v664
        %v753 = vunpack.c.l.b16 %v665
        %v754 = vunpack.c.l.b16 %v666
        %v755 = vunpack.c.l.b16 %v667
        %v756 = vunpack.c.l.b16 %v668
        %v757 = vunpack.c.l.b16 %v669
        %v758 = vunpack.c.l.b16 %v670
        %v759 = vunpack.c.l.b16 %v671
        %v760 = vunpack.c.l.b16 %v672
        %v761 = vunpack.c.l.b16 %v673
        %v762 = vunpack.c.l.b16 %v674
        %v763 = vunpack.c.l.b16 %v675
        %v764 = vpack.c.b16 %v733, %v732
        %v765 = vpack.c.b16 %v735, %v734
        %v766 = vpack.c.b16 %v737, %v736
        %v767 = vpack.c.b16 %v739, %v738
        %v768 = vpack.c.b16 %v741, %v740
        %v769 = vpack.c.b16 %v743, %v742
        %v770 = vpack.c.b16 %v745, %v744
        %v771 = vpack.c.b16 %v747, %v746
        %v772 = vpack.c.b16 %v749, %v748
        %v773 = vpack.c.b16 %v751, %v750
        %v774 = vpack.c.b16 %v753, %v752
        %v775 = vpack.c.b16 %v755, %v754
        %v776 = vpack.c.b16 %v757, %v756
        %v777 = vpack.c.b16 %v759, %v758
        %v778 = vpack.c.b16 %v761, %v760
        %v779 = vpack.c.b16 %v763, %v762
        %796 = vmatprep.subr.bf16.mxu0 0
        %797 = vmatpush1.bf16.msra.mxu0 %v771
        %798 = vmatprep.subr.bf16.mxu0 0
        %799 = vmatpush1.bf16.msra.mxu0 %v770
        %800 = vmatprep.subr.bf16.mxu0 0
        %801 = vmatpush1.bf16.msra.mxu0 %v769
        %802 = vmatprep.subr.bf16.mxu0 0
        %803 = vmatpush1.bf16.msra.mxu0 %v768
        %804 = vmatprep.subr.bf16.mxu0 0
        %805 = vmatpush1.bf16.msra.mxu0 %v767
        %806 = vmatprep.subr.bf16.mxu0 0
        %807 = vmatpush1.bf16.msra.mxu0 %v766
        %808 = vmatprep.subr.bf16.mxu0 0
        %809 = vmatpush1.bf16.msra.mxu0 %v765
        %810 = vmatprep.subr.bf16.mxu0 0
        %811 = vmatpush1.bf16.msra.mxu0 %v764
        %812 = vmatprep.subr.bf16.mxu0 0
        %813 = vmatpush2.bf16.msra.mxu0 %v779
        %814 = vmatprep.subr.bf16.mxu0 0
        %815 = vmatpush2.bf16.msra.mxu0 %v778
        %816 = vmatprep.subr.bf16.mxu0 0
        %817 = vmatpush2.bf16.msra.mxu0 %v777
        %818 = vmatprep.subr.bf16.mxu0 0
        %819 = vmatpush2.bf16.msra.mxu0 %v776
        %820 = vmatprep.subr.bf16.mxu0 0
        %821 = vmatpush2.bf16.msra.mxu0 %v775
        %822 = vmatprep.subr.bf16.mxu0 0
        %823 = vmatpush2.bf16.msra.mxu0 %v774
        %824 = vmatprep.subr.bf16.mxu0 0
        %825 = vmatpush2.bf16.msra.mxu0 %v773
        %826 = vmatprep.subr.bf16.mxu0 0
        %827 = vmatpush2.bf16.msra.mxu0 %v772
        %828 = vmatprep.mubr.bf16.mxu0 %v693
        %829 = vmatmul.mubr.bf16.gmra.mxu0 %v692
        %v830 = vpop.f32.mrf.mxu0
        %v831 = vadd.f32 %v681, %v830
        %v832 = vpop.f32.mrf.mxu0
        %v833 = vpop.f32.mrf.mxu0
        %v834 = vadd.f32 %v681, %v833
        %v835 = vpop.f32.mrf.mxu0
        %836 = vmatprep.mubr.bf16.mxu0 %v695
        %837 = vmatmul.mubr.bf16.gmra.mxu0 %v694
        %v838 = vpop.f32.mrf.mxu0
        %v839 = vadd.f32 %v681, %v838
        %v840 = vpop.f32.mrf.mxu0
        %v841 = vpop.f32.mrf.mxu0
        %v842 = vpop.f32.mrf.mxu0
        %843 = vdwg.mxu0
        %v844 = vmax.f32 %v831, 0.0
        %v845 = vmax.f32 %v834, 0.0
        %v846 = vmax.f32 %v839, 0.0
        %v847 = vpack.c.bf16 %v845, %v844
        %v848 = vpack.c.bf16 %v846, %v846
        %v849 = vld [vmem:[#allocation11] sm:$0xf]
        %v850 = vld [vmem:[#allocation11 + $0x4] sm:$0xf]
        %v851 = vld [vmem:[#allocation11 + $0x8] sm:$0xf]
        %v852 = vld [vmem:[#allocation11 + $0xc] sm:$0xf]
        %v853 = vld [vmem:[#allocation11 + $0x10] sm:$0xf]
        %v854 = vld [vmem:[#allocation11 + $0x14] sm:$0xf]
        %v855 = vld [vmem:[#allocation11 + $0x18] sm:$0xf]
        %v856 = vld [vmem:[#allocation11 + $0x1c] sm:$0xf]
        %v857 = vld [vmem:[#allocation11 + $0x20] sm:$0xf]
        %v858 = vld [vmem:[#allocation11 + $0x24] sm:$0xf]
        %v859 = vld [vmem:[#allocation11 + $0x28] sm:$0xf]
        %v860 = vld [vmem:[#allocation11 + $0x2c] sm:$0xf]
        %v861 = vld [vmem:[#allocation11 + $0x30] sm:$0xf]
        %v862 = vld [vmem:[#allocation11 + $0x34] sm:$0xf]
        %v863 = vld [vmem:[#allocation11 + $0x38] sm:$0xf]
        %v864 = vld [vmem:[#allocation11 + $0x3c] sm:$0xf]
        %v865 = vld [vmem:[%s7] sm:$0x1]
        %v867 = vlaneseq
        %v868 = vshrl.u32 %v867, 7
        %v869 = vsub.s32 0, %v868
        %v870 = vrot.slane %v865, %v869
        %v888 = vunpack.c.l.b16 %v849
        %v889 = vunpack.c.l.b16 %v850
        %v890 = vunpack.c.l.b16 %v851
        %v891 = vunpack.c.l.b16 %v852
        %v892 = vunpack.c.l.b16 %v853
        %v893 = vunpack.c.l.b16 %v854
        %v894 = vunpack.c.l.b16 %v855
        %v895 = vunpack.c.l.b16 %v856
        %v896 = vunpack.c.l.b16 %v857
        %v897 = vunpack.c.l.b16 %v858
        %v898 = vunpack.c.l.b16 %v859
        %v899 = vunpack.c.l.b16 %v860
        %v900 = vunpack.c.l.b16 %v861
        %v901 = vunpack.c.l.b16 %v862
        %v902 = vunpack.c.l.b16 %v863
        %v903 = vunpack.c.l.b16 %v864
        %v904 = vpack.c.b16 %v889, %v888
        %v905 = vpack.c.b16 %v891, %v890
        %v906 = vpack.c.b16 %v893, %v892
        %v907 = vpack.c.b16 %v895, %v894
        %v908 = vpack.c.b16 %v897, %v896
        %v909 = vpack.c.b16 %v899, %v898
        %v910 = vpack.c.b16 %v901, %v900
        %v911 = vpack.c.b16 %v903, %v902
        %920 = vmatprep.subr.bf16.mxu0 0
        %921 = vmatpush1.bf16.msra.mxu0 %v911
        %922 = vmatprep.subr.bf16.mxu0 0
        %923 = vmatpush1.bf16.msra.mxu0 %v910
        %924 = vmatprep.subr.bf16.mxu0 0
        %925 = vmatpush1.bf16.msra.mxu0 %v909
        %926 = vmatprep.subr.bf16.mxu0 0
        %927 = vmatpush1.bf16.msra.mxu0 %v908
        %928 = vmatprep.subr.bf16.mxu0 0
        %929 = vmatpush1.bf16.msra.mxu0 %v907
        %930 = vmatprep.subr.bf16.mxu0 0
        %931 = vmatpush1.bf16.msra.mxu0 %v906
        %932 = vmatprep.subr.bf16.mxu0 0
        %933 = vmatpush1.bf16.msra.mxu0 %v905
        %934 = vmatprep.subr.bf16.mxu0 0
        %935 = vmatpush1.bf16.msra.mxu0 %v904
        %936 = vmatprep.subr.bf16.mxu0 0
        %937 = vmatpush2.bf16.msra.mxu0 0
        %938 = vmatprep.subr.bf16.mxu0 0
        %939 = vmatpush2.bf16.msra.mxu0 0
        %940 = vmatprep.subr.bf16.mxu0 0
        %941 = vmatpush2.bf16.msra.mxu0 0
        %942 = vmatprep.subr.bf16.mxu0 0
        %943 = vmatpush2.bf16.msra.mxu0 0
        %944 = vmatprep.subr.bf16.mxu0 0
        %945 = vmatpush2.bf16.msra.mxu0 0
        %946 = vmatprep.subr.bf16.mxu0 0
        %947 = vmatpush2.bf16.msra.mxu0 0
        %948 = vmatprep.subr.bf16.mxu0 0
        %949 = vmatpush2.bf16.msra.mxu0 0
        %950 = vmatprep.subr.bf16.mxu0 0
        %951 = vmatpush2.bf16.msra.mxu0 0
        %952 = vmatprep.mubr.bf16.mxu0 0
        %953 = vmatmul.mubr.bf16.gmra.mxu0 %v847
        %v954 = vpop.f32.mrf.mxu0
        %v955 = vadd.f32 %v870, %v954
        %v956 = vpop.f32.mrf.mxu0
        %v957 = vpop.f32.mrf.mxu0
        %v958 = vadd.f32 %v870, %v957
        %v959 = vpop.f32.mrf.mxu0
        %960 = vmatprep.mubr.bf16.mxu0 0
        %961 = vmatmul.mubr.bf16.gmra.mxu0 %v848
        %v962 = vpop.f32.mrf.mxu0
        %v963 = vadd.f32 %v870, %v962
        %v964 = vpop.f32.mrf.mxu0
        %v965 = vpop.f32.mrf.mxu0
        %v966 = vpop.f32.mrf.mxu0
        %967 = vdwg.mxu0
        %968 = vst [vmem:[%s422] sm:$0xff] %v955
        %969 = vst [vmem:[%s422 + $0x8] sm:$0xff] %v958
        %970 = vst [vmem:[%s422 + $0x10] sm:$0xff] %v963
        %s971 = sand.u32 %s225, 1
        %s972 = scalar_lea.sflag [#allocation5], %s971
        %s973 = sand.u32 %s225, 1
        %s974 = smul.addr %s973, 24
        %s975 = scalar_lea.vmem [#allocation12], %s974
        // Predicated region
        $region81: #{tpu_custom_call.1} parent=51 // pred_check
          %p976 = pneg %p235
        $region82: #{tpu_custom_call.1} parent=51 // pred_check_branch
          %978 = sbr.rel (%p976) target = $region84
        $region83: #{tpu_custom_call.1} parent=51 // pred_region
          %s979 = smul.u32 3, %s29
          %s981 = ssub.s32 384, 384
          %982 = vsyncadd %s972, %s981
          %s983 = smul.addr %s979, 128
          %s984 = scalar_lea.hbm %s8, %s983
          %s985 = sshll.u32 %s975, 4
          %s986 = int_to_ptr.vmem [resolvable:$true] %s985
          %991 = dma.vmem_to_hbm [thread:$0]  %s986, 384, %s984, %s972, 128, 128, 8
        $region84: #{tpu_custom_call.1} parent=51 // pred_fallthru
          _
      $region52: #{tpu_custom_call.1} parent=5 // pred_fallthru
        _
      %p992 = scmp.le.s32.totalorder 2, %s24
      // Predicated region
      $region85: #{tpu_custom_call.1} parent=5 // pred_check
        %p993 = pneg %p992
      $region86: #{tpu_custom_call.1} parent=5 // pred_check_branch
        %995 = sbr.rel (%p993) target = $region88
      $region87: #{tpu_custom_call.1} parent=5 // pred_region
        %s996 = ssub.s32 %s24, 2
        // Predicated region
        $region89: #{tpu_custom_call.1} parent=87 // pred_check
          %p997 = pneg %p241
        $region90: #{tpu_custom_call.1} parent=87 // pred_check_branch
          %999 = sbr.rel (%p997) target = $region92
        $region91: #{tpu_custom_call.1} parent=87 // pred_region
          %s1000 = sand.u32 %s226, 1
          %s1001 = scalar_lea.sflag [#allocation5], %s1000
          %s1002 = sand.u32 %s226, 1
          %s1003 = smul.addr %s1002, 24
          %s1004 = scalar_lea.vmem [#allocation12], %s1003
          %1005 = dma.done %s1001, 384
        $region92: #{tpu_custom_call.1} parent=87 // pred_fallthru
          _
      $region88: #{tpu_custom_call.1} parent=5 // pred_fallthru
        _
    $region6: #{tpu_custom_call.1} parent=1 // loop_footer
      %s28 = sadd.s32 1, %s24
    $region7: #{tpu_custom_call.1} parent=1 // loop_footer_branch
      %23 = sbr.rel target = $region3
    $region8: #{tpu_custom_call.1} parent=1 // loop_exit
      _
    %1006 = vsyncpa [#allocation4], 1
    %s1007 = scalar_lea.sflag [#allocation4], 1
    %1008 = vsyncpa %s1007, 1
    %1009 = vsyncpa [#allocation7], 1
    %s1010 = scalar_lea.sflag [#allocation7], 1
    %1011 = vsyncpa %s1010, 1
    %1012 = vsyncpa [#allocation10], 1
    %1013 = vsyncpa [#allocation5], 1
    %s1014 = scalar_lea.sflag [#allocation5], 1
    %1015 = vsyncpa %s1014, 1

</llo_original>
